<compile_context>
chip_gen: v5e
topology: v5e:2x2
jax: 0.10.0
libtpu: 0.0.40
codegen_flags: <defaults>
</compile_context>

<pallas_src>
import math
from typing import List

import jax
import jax.numpy as jnp
from jax.experimental import pallas as pl
from jax.experimental.pallas import tpu as pltpu


LANE = 128           # TPU lane width
SUBLANE_BF16 = 16    # bf16 sublane packing (one packed vreg row-group)
V7X_VMEM = 64 << 20  # tightest physical VMEM across v5e/v6e/v7x


def _round_up(x: int, m: int) -> int:
    return ((x + m - 1) // m) * m


# ----------------------------------------------------------------------------
# Pallas kernel: the whole fused ModularMLP for one batch tile.
# ----------------------------------------------------------------------------
def _make_fused_mlp_kernel(n_layers: int):
    def kernel(*refs):
        # refs = (x_ref, w0, b0, w1, b1, ..., out_ref)
        x_ref = refs[0]
        out_ref = refs[-1]
        h = x_ref[...]                               # bf16 (batch_tile, width_in)
        for l in range(n_layers):
            w = refs[1 + 2 * l][...]                 # bf16 (K_l, N_l), N_l % 128 == 0
            b = refs[2 + 2 * l][...]                 # f32  (1, N_l)
            lhs = h if l == 0 else h.astype(jnp.bfloat16)
            h = jnp.dot(lhs, w, preferred_element_type=jnp.float32) + b
            if l < n_layers - 1:                     # MLP pops the trailing ReLU
                h = jnp.maximum(h, 0.0)
        out_ref[...] = h.astype(out_ref.dtype)

    return kernel


# ----------------------------------------------------------------------------
# Parameter fusion: stack per-module weights into one lane-dense weight chain.
# ----------------------------------------------------------------------------
def _block_diag(mats):
    rows = sum(m.shape[0] for m in mats)
    cols = sum(m.shape[1] for m in mats)
    out = jnp.zeros((rows, cols), mats[0].dtype)
    r = c = 0
    for m in mats:
        out = out.at[r:r + m.shape[0], c:c + m.shape[1]].set(m)
        r += m.shape[0]
        c += m.shape[1]
    return out


def fuse_modular_mlp_params(all_params, modular_input: bool = False,
                            lane_multiple: int = LANE):
    """Pack per-module params into fused (bf16 W, f32 b) per layer.

    Layer 0 with a shared input: weights concatenated along the output axis.
    Layer 0 with modular inputs and all deeper layers: block-diagonal packing.
    Every layer's fused output width (and therefore the next layer's K) is
    zero-padded to a multiple of `lane_multiple` so every load/store in the
    kernel is lane-dense; padding is numerically exact.

    lane_multiple=256 feeds v6e/v7x's 256-wide MXU fully once the kernel is
    MXU-bound; 128 keeps VMEM tight at small widths.
    """
    # TODO(synk): for non-toy hidden sizes, replace block-diag packing of deep
    # layers with stacked (n_modules, h_in, h_out) weights + a per-module grid
    # axis to avoid the n_modules x FLOP/DMA/VMEM blow-up of off-diagonal zeros.
    n_layers = len(all_params[0])
    total_out = sum(p[-1][0].shape[1] for p in all_params)

    fused = []
    prev_col_pad = 0
    for l in range(n_layers):
        ws = [p[l][0] for p in all_params]
        bs = [p[l][1] for p in all_params]
        if l == 0 and not modular_input:
            w = jnp.concatenate(ws, axis=1)          # shared input -> wide matmul
        else:
            w = _block_diag(ws)                      # independent module paths
        b = jnp.concatenate(bs, axis=0)

        # Pad K to match the previous layer's padded output width (zero rows).
        if prev_col_pad:
            w = jnp.pad(w, ((0, prev_col_pad), (0, 0)))

        # Pad N to a lane multiple (zero cols / zero bias) -> lane-dense layer.
        n = b.shape[0]
        n_padded = max(lane_multiple, _round_up(n, lane_multiple))
        col_pad = n_padded - n
        if col_pad:
            w = jnp.pad(w, ((0, 0), (0, col_pad)))
            b = jnp.pad(b, ((0, col_pad),))
        prev_col_pad = col_pad

        fused.append((w.astype(jnp.bfloat16),        # native MXU dtype
                      b.reshape(1, -1).astype(jnp.float32)))

    out_pad = fused[-1][1].shape[1]
    return fused, total_out, out_pad


# ----------------------------------------------------------------------------
# Forward: single pallas_call, batch-tiled grid, weights resident in VMEM.
# ----------------------------------------------------------------------------
def modular_mlp_forward(x, fused_params, total_out, out_pad,
                        modular_input: bool = False, batch_tile: int = None):
    if modular_input:
        assert isinstance(x, (list, tuple)), "modular_input=True expects list/tuple"
        x = jnp.concatenate(list(x), axis=1)

    # Feed bf16 directly (kernel casts to bf16 before the first dot anyway):
    # identical math, half the input-activation DMA bytes.
    x = x.astype(jnp.bfloat16)
    batch, in_width = x.shape
    n_layers = len(fused_params)

    # ---- batch grid sizing: multiple of 16, 256-512 rows once batch allows ----
    if batch_tile is None:
        batch_tile = min(_round_up(batch, SUBLANE_BF16), 512)
    batch_tile = max(SUBLANE_BF16, _round_up(batch_tile, SUBLANE_BF16))
    padded_batch = _round_up(batch, batch_tile)
    if padded_batch != batch:
        x = jnp.pad(x, ((0, padded_batch - batch), (0, 0)))
    n_tiles = padded_batch // batch_tile

    flat_inputs = [x]
    in_specs = [pl.BlockSpec((batch_tile, in_width), lambda i: (i, 0))]
    for w, b in fused_params:
        flat_inputs += [w, b]
        # Full-array blocks with a constant index_map: weights/biases are
        # DMA'd once and stay VMEM-resident across all batch-grid steps.
        in_specs.append(pl.BlockSpec(w.shape, lambda i: (0, 0)))
        in_specs.append(pl.BlockSpec(b.shape, lambda i: (0, 0)))
    out_spec = pl.BlockSpec((batch_tile, out_pad), lambda i: (i, 0))

    # ---- cost estimate: lets XLA overlap surrounding ops with the call ----
    flops = 0
    bytes_accessed = x.size * 2 + padded_batch * out_pad * 4
    for w, b in fused_params:
        flops += 2 * padded_batch * w.shape[0] * w.shape[1]
        bytes_accessed += w.size * 2 + b.size * 4
    cost = pl.CostEstimate(flops=int(flops), transcendentals=0,
                           bytes_accessed=int(bytes_accessed))

    # ---- explicit VMEM budget (re-derived for v7x's 64 MiB physical) ----
    weight_bytes = sum(w.size * 2 + b.size * 4 for w, b in fused_params)
    act_bytes = 2 * (batch_tile * in_width * 2 + batch_tile * out_pad * 4)  # 2x-buffered tiles
    max_width = max(b.shape[1] for _, b in fused_params)
    interm_bytes = 2 * 4 * batch_tile * max_width                           # live f32 intermediates
    needed = weight_bytes + act_bytes + interm_bytes
    vmem_limit = int(min(V7X_VMEM, max(2 * needed, 8 << 20)))

    kernel = _make_fused_mlp_kernel(n_layers)

    out_padded = pl.pallas_call(
        kernel,
        out_shape=jax.ShapeDtypeStruct((padded_batch, out_pad), jnp.float32),
        grid=(n_tiles,),
        in_specs=in_specs,
        out_specs=out_spec,
        compiler_params=pltpu.CompilerParams(
            dimension_semantics=("parallel",),       # v7x: 2 TCs split the batch
            vmem_limit_bytes=vmem_limit),
        cost_estimate=cost,
    )(*flat_inputs)

    if padded_batch == batch and out_pad == total_out:
        return out_padded
    # TODO(synk): fuse this slice into the consumer (or keep consumers on the
    # padded slab) to avoid an extra HBM round-trip of the output at scale.
    return out_padded[:batch, :total_out]


# ----------------------------------------------------------------------------
# Parameter init (PyTorch nn.Linear default init, W stored as (in, out)).
# ----------------------------------------------------------------------------
def init_linear(key, fan_in: int, fan_out: int):
    kw, kb = jax.random.split(key)
    bound = 1.0 / math.sqrt(fan_in)
    w = jax.random.uniform(kw, (fan_in, fan_out), jnp.float32, -bound, bound)
    b = jax.random.uniform(kb, (fan_out,), jnp.float32, -bound, bound)
    return w, b


def init_modular_mlp(key, in_dim: int, out_dims: List[int], hidden_dims: List[int]):
    """Returns list (per module) of list (per layer) of (W, b)."""
    all_params = []
    for out_dim in out_dims:
        dims = [in_dim] + (list(hidden_dims) if hidden_dims is not None else []) + [out_dim]
        module_params = []
        for h0, h1 in zip(dims, dims[1:]):
            key, sub = jax.random.split(key)
            module_params.append(init_linear(sub, h0, h1))
        all_params.append(module_params)
    return all_params


# ----------------------------------------------------------------------------
# Pure-JAX references.
# ----------------------------------------------------------------------------
def modular_mlp_ref_f32(x_or_list, all_params, modular_input: bool = False):
    outs = []
    for m, params in enumerate(all_params):
        h = x_or_list[m] if modular_input else x_or_list
        for l, (w, b) in enumerate(params):
            h = h @ w + b
            if l < len(params) - 1:
                h = jnp.maximum(h, 0.0)
        outs.append(h)
    return jnp.concatenate(outs, axis=1)


def modular_mlp_ref_bf16(x_or_list, all_params, modular_input: bool = False):
    # Mirrors the kernel's numerics: bf16 matmul inputs, f32 accum + epilogue.
    outs = []
    for m, params in enumerate(all_params):
        h = (x_or_list[m] if modular_input else x_or_list).astype(jnp.float32)
        for l, (w, b) in enumerate(params):
            h = jnp.dot(h.astype(jnp.bfloat16), w.astype(jnp.bfloat16),
                        preferred_element_type=jnp.float32) + b
            if l < len(params) - 1:
                h = jnp.maximum(h, 0.0)
        outs.append(h)
    return jnp.concatenate(outs, axis=1)


if __name__ == "__main__":
    key = jax.random.PRNGKey(0)

    batch = 8
    in_dim = 16
    hidden_dims = [32, 32]
    out_dims = [8, 16, 24]           # n_modules = 3, concat output width = 48

    k_param, k_x = jax.random.split(key)
    all_params = init_modular_mlp(k_param, in_dim, out_dims, hidden_dims)
    x = jax.random.normal(k_x, (batch, in_dim), jnp.float32)

    # ---- shared-input path (modular_input=False) ----
    fused, total_out, out_pad = fuse_modular_mlp_params(all_params, modular_input=False)
    out = modular_mlp_forward(x, fused, total_out, out_pad, modular_input=False)
    out = jax.block_until_ready(out)
    assert out.shape == (batch, sum(out_dims)), out.shape

    ref_bf16 = modular_mlp_ref_bf16(x, all_params)
    ref_f32 = modular_mlp_ref_f32(x, all_params)
    assert jnp.allclose(out, ref_bf16, atol=1e-3, rtol=1e-3), "mismatch vs bf16 reference"
    assert jnp.allclose(out, ref_f32, atol=1e-1, rtol=1e-1), "mismatch vs f32 reference"

    # ---- modular-input path (modular_input=True) ----
    keys = jax.random.split(k_x, len(out_dims))
    x_list = [jax.random.normal(k, (batch, in_dim), jnp.float32) for k in keys]
    fused_m, total_out_m, out_pad_m = fuse_modular_mlp_params(all_params, modular_input=True)
    out_m = modular_mlp_forward(x_list, fused_m, total_out_m, out_pad_m, modular_input=True)
    out_m = jax.block_until_ready(out_m)
    assert out_m.shape == (batch, sum(out_dims)), out_m.shape
    ref_m = modular_mlp_ref_bf16(x_list, all_params, modular_input=True)
    assert jnp.allclose(out_m, ref_m, atol=1e-3, rtol=1e-3), "mismatch (modular input)"

    # ---- larger batch to exercise the multi-tile grid path ----
    xb = jax.random.normal(jax.random.PRNGKey(7), (600, in_dim), jnp.float32)
    out_b = modular_mlp_forward(xb, fused, total_out, out_pad, batch_tile=256)
    out_b = jax.block_until_ready(out_b)
    ref_b = modular_mlp_ref_bf16(xb, all_params)
    assert out_b.shape == (600, sum(out_dims)), out_b.shape
    assert jnp.allclose(out_b, ref_b, atol=1e-3, rtol=1e-3), "mismatch (batched grid)"

    print("KERNEL_OK")
</pallas_src>

<mosaic_0001>
module attributes {stable_mosaic.version = 11 : i64} {
  func.func @kernel(%arg0: i32, %arg1: memref<16x16xbf16, #tpu.memory_space<vmem>>, %arg2: memref<16x128xbf16, #tpu.memory_space<vmem>>, %arg3: memref<1x128xf32, #tpu.memory_space<vmem>>, %arg4: memref<128x128xbf16, #tpu.memory_space<vmem>>, %arg5: memref<1x128xf32, #tpu.memory_space<vmem>>, %arg6: memref<128x128xbf16, #tpu.memory_space<vmem>>, %arg7: memref<1x128xf32, #tpu.memory_space<vmem>>, %arg8: memref<16x128xf32, #tpu.memory_space<vmem>>) attributes {dimension_semantics = [#tpu.dimension_semantics<parallel>], iteration_bounds = array<i64: 1>, scalar_prefetch = 0 : i64, scratch_operands = 0 : i64, tpu.core_type = #tpu.core_type<tc>, window_params = [{transform_indices = @transform_0, window_bounds = array<i64: 16, 16>}, {pipeline_mode = #tpu.pipeline_mode<synchronous>, transform_indices = @transform_1, window_bounds = array<i64: 16, 128>}, {pipeline_mode = #tpu.pipeline_mode<synchronous>, transform_indices = @transform_2, window_bounds = array<i64: 1, 128>}, {pipeline_mode = #tpu.pipeline_mode<synchronous>, transform_indices = @transform_3, window_bounds = array<i64: 128, 128>}, {pipeline_mode = #tpu.pipeline_mode<synchronous>, transform_indices = @transform_4, window_bounds = array<i64: 1, 128>}, {pipeline_mode = #tpu.pipeline_mode<synchronous>, transform_indices = @transform_5, window_bounds = array<i64: 128, 128>}, {pipeline_mode = #tpu.pipeline_mode<synchronous>, transform_indices = @transform_6, window_bounds = array<i64: 1, 128>}, {transform_indices = @transform_7, window_bounds = array<i64: 16, 128>}]} {
    %c0 = arith.constant 0 : index
    %c0_0 = arith.constant 0 : index
    %0 = vector.load %arg1[%c0, %c0_0] : memref<16x16xbf16, #tpu.memory_space<vmem>>, vector<16x16xbf16>
    %c0_1 = arith.constant 0 : index
    %c0_2 = arith.constant 0 : index
    %1 = vector.load %arg2[%c0_1, %c0_2] : memref<16x128xbf16, #tpu.memory_space<vmem>>, vector<16x128xbf16>
    %c0_3 = arith.constant 0 : index
    %c0_4 = arith.constant 0 : index
    %2 = vector.load %arg3[%c0_3, %c0_4] : memref<1x128xf32, #tpu.memory_space<vmem>>, vector<1x128xf32>
    %cst = arith.constant dense<0.000000e+00> : vector<16x128xf32>
    %3 = tpu.matmul %0, %1, %cst {dimension_numbers = #tpu.dot_dimension_numbers<[1], [0], [0], [1], [0, 0, 1, 1], [], []>} : vector<16x16xbf16>, vector<16x128xbf16>, vector<16x128xf32> -> vector<16x128xf32>
    %4 = vector.broadcast %2 : vector<1x128xf32> to vector<16x128xf32>
    %5 = arith.addf %3, %4 : vector<16x128xf32>
    %cst_5 = arith.constant 0.000000e+00 : f32
    %6 = vector.broadcast %cst_5 : f32 to vector<16x128xf32>
    %7 = arith.maximumf %5, %6 : vector<16x128xf32>
    %c0_6 = arith.constant 0 : index
    %c0_7 = arith.constant 0 : index
    %8 = vector.load %arg4[%c0_6, %c0_7] : memref<128x128xbf16, #tpu.memory_space<vmem>>, vector<128x128xbf16>
    %c0_8 = arith.constant 0 : index
    %c0_9 = arith.constant 0 : index
    %9 = vector.load %arg5[%c0_8, %c0_9] : memref<1x128xf32, #tpu.memory_space<vmem>>, vector<1x128xf32>
    %10 = arith.truncf %7 : vector<16x128xf32> to vector<16x128xbf16>
    %cst_10 = arith.constant dense<0.000000e+00> : vector<16x128xf32>
    %11 = tpu.matmul %10, %8, %cst_10 {dimension_numbers = #tpu.dot_dimension_numbers<[1], [0], [0], [1], [0, 0, 1, 1], [], []>} : vector<16x128xbf16>, vector<128x128xbf16>, vector<16x128xf32> -> vector<16x128xf32>
    %12 = vector.broadcast %9 : vector<1x128xf32> to vector<16x128xf32>
    %13 = arith.addf %11, %12 : vector<16x128xf32>
    %cst_11 = arith.constant 0.000000e+00 : f32
    %14 = vector.broadcast %cst_11 : f32 to vector<16x128xf32>
    %15 = arith.maximumf %13, %14 : vector<16x128xf32>
    %c0_12 = arith.constant 0 : index
    %c0_13 = arith.constant 0 : index
    %16 = vector.load %arg6[%c0_12, %c0_13] : memref<128x128xbf16, #tpu.memory_space<vmem>>, vector<128x128xbf16>
    %c0_14 = arith.constant 0 : index
    %c0_15 = arith.constant 0 : index
    %17 = vector.load %arg7[%c0_14, %c0_15] : memref<1x128xf32, #tpu.memory_space<vmem>>, vector<1x128xf32>
    %18 = arith.truncf %15 : vector<16x128xf32> to vector<16x128xbf16>
    %cst_16 = arith.constant dense<0.000000e+00> : vector<16x128xf32>
    %19 = tpu.matmul %18, %16, %cst_16 {dimension_numbers = #tpu.dot_dimension_numbers<[1], [0], [0], [1], [0, 0, 1, 1], [], []>} : vector<16x128xbf16>, vector<128x128xbf16>, vector<16x128xf32> -> vector<16x128xf32>
    %20 = vector.broadcast %17 : vector<1x128xf32> to vector<16x128xf32>
    %21 = arith.addf %19, %20 : vector<16x128xf32>
    %c0_17 = arith.constant 0 : index
    %c0_18 = arith.constant 0 : index
    %22 = vector.load %arg8[%c0_17, %c0_18] : memref<16x128xf32, #tpu.memory_space<vmem>>, vector<16x128xf32>
    tpu.vector_store %arg8[%c0_17, %c0_18], %21 {strides = array<i32>} : memref<16x128xf32, #tpu.memory_space<vmem>>, vector<16x128xf32>,
    return
  }
  func.func @transform_0(%arg0: i32) -> (i32, i32) {
    %c0_i32 = arith.constant 0 : i32
    %c0_i32_0 = arith.constant 0 : i32
    return %arg0, %c0_i32 : i32, i32
  }
  func.func @transform_1(%arg0: i32) -> (i32, i32) {
    %c0_i32 = arith.constant 0 : i32
    %c0_i32_0 = arith.constant 0 : i32
    %c0_i32_1 = arith.constant 0 : i32
    return %c0_i32, %c0_i32_0 : i32, i32
  }
  func.func @transform_2(%arg0: i32) -> (i32, i32) {
    %c0_i32 = arith.constant 0 : i32
    %c0_i32_0 = arith.constant 0 : i32
    %c0_i32_1 = arith.constant 0 : i32
    return %c0_i32, %c0_i32_0 : i32, i32
  }
  func.func @transform_3(%arg0: i32) -> (i32, i32) {
    %c0_i32 = arith.constant 0 : i32
    %c0_i32_0 = arith.constant 0 : i32
    %c0_i32_1 = arith.constant 0 : i32
    return %c0_i32, %c0_i32_0 : i32, i32
  }
  func.func @transform_4(%arg0: i32) -> (i32, i32) {
    %c0_i32 = arith.constant 0 : i32
    %c0_i32_0 = arith.constant 0 : i32
    %c0_i32_1 = arith.constant 0 : i32
    return %c0_i32, %c0_i32_0 : i32, i32
  }
  func.func @transform_5(%arg0: i32) -> (i32, i32) {
    %c0_i32 = arith.constant 0 : i32
    %c0_i32_0 = arith.constant 0 : i32
    %c0_i32_1 = arith.constant 0 : i32
    return %c0_i32, %c0_i32_0 : i32, i32
  }
  func.func @transform_6(%arg0: i32) -> (i32, i32) {
    %c0_i32 = arith.constant 0 : i32
    %c0_i32_0 = arith.constant 0 : i32
    %c0_i32_1 = arith.constant 0 : i32
    return %c0_i32, %c0_i32_0 : i32, i32
  }
  func.func @transform_7(%arg0: i32) -> (i32, i32) {
    %c0_i32 = arith.constant 0 : i32
    %c0_i32_0 = arith.constant 0 : i32
    return %arg0, %c0_i32 : i32, i32
  }
}

</mosaic_0001>

<llo_original>
// kernel: tpu_custom_call.1
$region0: #{tpu_custom_call.1}
  #allocation0 [shape = 'u32[]', space=smem, size = 0x4, offset = 0x4, fixed_abs, tag = 'smem constant byte address 0x4 - core index']
  #allocation1 [shape = 'u32[72,128]{1,0:T(1,128)}', space=vmem, size = 0x9000, scoped, tag = 'internal scratch']
  %s0 = inlined_call_operand.hbm [shape: bf16[16,16], index: 0, kind: input, shape index: {}]
  %s1 = inlined_call_operand.hbm [shape: bf16[16,128], index: 1, kind: input, shape index: {}]
  %s2 = inlined_call_operand.vmem [shape: f32[1,128], index: 2, kind: input, shape index: {}]
  %s3 = inlined_call_operand.hbm [shape: bf16[128,128], index: 3, kind: input, shape index: {}]
  %s4 = inlined_call_operand.vmem [shape: f32[1,128], index: 4, kind: input, shape index: {}]
  %s5 = inlined_call_operand.hbm [shape: bf16[128,128], index: 5, kind: input, shape index: {}]
  %s6 = inlined_call_operand.vmem [shape: f32[1,128], index: 6, kind: input, shape index: {}]
  %s7 = inlined_call_operand.hbm [shape: f32[16,128], index: 7, kind: output, shape index: {}]
  %s8 = sld [smem:[#allocation0]]
  $region54: #{tpu_custom_call.1} parent=0
    _
  %s10 = ssub.s32 1, %s8
  %s11 = scalar_select 0, %s10, %s8
  $region1: #{tpu_custom_call.1} parent=0
    #allocation2 [shape = 'u8[4096]{0}', space=vmem, size = 0x1000, scoped, tag = 'input window, operand 0, single buffered']
    #allocation3 [shape = 's32[1]{0}', space=sflag, size = 0x4, scoped, tag = 'scoped memory for tpu_custom_call.1']
    #allocation4 [shape = 's32[1]{0}', space=sflag, size = 0x4, scoped, tag = 'scoped memory for tpu_custom_call.1']
    #allocation5 [shape = 'u8[4096]{0}', space=vmem, size = 0x1000, scoped, tag = 'input window, operand 1, single buffered']
    #allocation6 [shape = 's32[1]{0}', space=sflag, size = 0x4, scoped, tag = 'scoped memory for tpu_custom_call.1']
    #allocation7 [shape = 'u8[32768]{0}', space=vmem, size = 0x8000, scoped, tag = 'input window, operand 3, single buffered']
    #allocation8 [shape = 'u8[32768]{0}', space=vmem, size = 0x8000, scoped, tag = 'input window, operand 5, single buffered']
    #allocation9 [shape = 's32[1]{0}', space=sflag, size = 0x4, scoped, tag = 'scoped memory for tpu_custom_call.1']
    #allocation10 [shape = 'u8[8192]{0}', space=vmem, size = 0x2000, scoped, tag = 'output window, operand 0, single buffered']
    %12 = vsyncpa [#allocation3], 0
    %13 = vsyncpa [#allocation6], 0
    %14 = vsyncpa [#allocation9], 0
    %15 = vsyncpa [#allocation4], 0
    // Predicated region
    $region2: #{tpu_custom_call.1} parent=1 // pred_check
      _
    $region3: #{tpu_custom_call.1} parent=1 // pred_check_branch
      %17 = sbr.rel (0) target = $region5
    $region4: #{tpu_custom_call.1} parent=1 // pred_region
      %19 = vsyncadd [#allocation3], 0
      %s20 = sshll.u32 %s0, 4
      %s21 = int_to_ptr.hbm [resolvable:$true] %s20
      %s22 = sshll.u32 [#allocation2], 4
      %s23 = int_to_ptr.vmem [resolvable:$true] %s22
      %28 = dma.hbm_to_vmem [thread:$0]  %s21, 128, %s23, [#allocation3], 64, 64, 4
    $region5: #{tpu_custom_call.1} parent=1 // pred_fallthru
      _
    // Predicated region
    $region6: #{tpu_custom_call.1} parent=1 // pred_check
      _
    $region7: #{tpu_custom_call.1} parent=1 // pred_check_branch
      %30 = sbr.rel (0) target = $region9
    $region8: #{tpu_custom_call.1} parent=1 // pred_region
      %32 = vsyncadd [#allocation6], 0
      %s33 = sshll.u32 %s1, 4
      %s34 = int_to_ptr.hbm [resolvable:$true] %s33
      %s35 = sshll.u32 [#allocation5], 4
      %s36 = int_to_ptr.vmem [resolvable:$true] %s35
      %41 = dma.hbm_to_vmem [thread:$0]  %s34, 128, %s36, [#allocation6], 64, 64, 4
    $region9: #{tpu_custom_call.1} parent=1 // pred_fallthru
      _
    // Predicated region
    $region10: #{tpu_custom_call.1} parent=1 // pred_check
      _
    $region11: #{tpu_custom_call.1} parent=1 // pred_check_branch
      %43 = sbr.rel (0) target = $region13
    $region12: #{tpu_custom_call.1} parent=1 // pred_region
      _
    $region13: #{tpu_custom_call.1} parent=1 // pred_fallthru
      _
    // Predicated region
    $region14: #{tpu_custom_call.1} parent=1 // pred_check
      _
    $region15: #{tpu_custom_call.1} parent=1 // pred_check_branch
      %45 = sbr.rel (0) target = $region17
    $region16: #{tpu_custom_call.1} parent=1 // pred_region
      %47 = vsyncadd [#allocation6], 0
      %s48 = sshll.u32 %s3, 4
      %s49 = int_to_ptr.hbm [resolvable:$true] %s48
      %s50 = sshll.u32 [#allocation7], 4
      %s51 = int_to_ptr.vmem [resolvable:$true] %s50
      %56 = dma.hbm_to_vmem [thread:$0]  %s49, 1024, %s51, [#allocation6], 64, 64, 4
    $region17: #{tpu_custom_call.1} parent=1 // pred_fallthru
      _
    // Predicated region
    $region18: #{tpu_custom_call.1} parent=1 // pred_check
      _
    $region19: #{tpu_custom_call.1} parent=1 // pred_check_branch
      %58 = sbr.rel (0) target = $region21
    $region20: #{tpu_custom_call.1} parent=1 // pred_region
      _
    $region21: #{tpu_custom_call.1} parent=1 // pred_fallthru
      _
    // Predicated region
    $region22: #{tpu_custom_call.1} parent=1 // pred_check
      _
    $region23: #{tpu_custom_call.1} parent=1 // pred_check_branch
      %60 = sbr.rel (0) target = $region25
    $region24: #{tpu_custom_call.1} parent=1 // pred_region
      %62 = vsyncadd [#allocation9], 0
      %s63 = sshll.u32 %s5, 4
      %s64 = int_to_ptr.hbm [resolvable:$true] %s63
      %s65 = sshll.u32 [#allocation8], 4
      %s66 = int_to_ptr.vmem [resolvable:$true] %s65
      %71 = dma.hbm_to_vmem [thread:$0]  %s64, 1024, %s66, [#allocation9], 64, 64, 4
    $region25: #{tpu_custom_call.1} parent=1 // pred_fallthru
      _
    // Predicated region
    $region26: #{tpu_custom_call.1} parent=1 // pred_check
      _
    $region27: #{tpu_custom_call.1} parent=1 // pred_check_branch
      %73 = sbr.rel (0) target = $region29
    $region28: #{tpu_custom_call.1} parent=1 // pred_region
      _
    $region29: #{tpu_custom_call.1} parent=1 // pred_fallthru
      _
    // Predicated region
    $region30: #{tpu_custom_call.1} parent=1 // pred_check
      _
    $region31: #{tpu_custom_call.1} parent=1 // pred_check_branch
      %75 = sbr.rel (0) target = $region33
    $region32: #{tpu_custom_call.1} parent=1 // pred_region
      %77 = dma.done [#allocation3], 128
    $region33: #{tpu_custom_call.1} parent=1 // pred_fallthru
      _
    // Predicated region
    $region34: #{tpu_custom_call.1} parent=1 // pred_check
      _
    $region35: #{tpu_custom_call.1} parent=1 // pred_check_branch
      %79 = sbr.rel (0) target = $region37
    $region36: #{tpu_custom_call.1} parent=1 // pred_region
      %81 = dma.done [#allocation6], 128
    $region37: #{tpu_custom_call.1} parent=1 // pred_fallthru
      _
    // Predicated region
    $region38: #{tpu_custom_call.1} parent=1 // pred_check
      _
    $region39: #{tpu_custom_call.1} parent=1 // pred_check_branch
      %83 = sbr.rel (0) target = $region41
    $region40: #{tpu_custom_call.1} parent=1 // pred_region
      %85 = dma.done [#allocation6], 1024
    $region41: #{tpu_custom_call.1} parent=1 // pred_fallthru
      _
    // Predicated region
    $region42: #{tpu_custom_call.1} parent=1 // pred_check
      _
    $region43: #{tpu_custom_call.1} parent=1 // pred_check_branch
      %87 = sbr.rel (0) target = $region45
    $region44: #{tpu_custom_call.1} parent=1 // pred_region
      %89 = dma.done [#allocation9], 1024
    $region45: #{tpu_custom_call.1} parent=1 // pred_fallthru
      _
    %v91 = vld [vmem:[#allocation2] sm:$0xf]
    %v92 = vld [vmem:[#allocation2 + $0x4] sm:$0xf]
    %v93 = vld [vmem:[#allocation5] sm:$0xf]
    %v94 = vld [vmem:[#allocation5 + $0x4] sm:$0xf]
    %v95 = vld [vmem:[%s2] sm:$0x1]
    %v97 = vperm.slane %v95, 0
    %v101 = vunpack.c.l.b16 %v91
    %v102 = vunpack.c.l.b16 %v92
    %v103 = vpack.c.b16 %v102, %v101
    %v106 = vunpack.c.l.b16 %v93
    %v107 = vunpack.c.l.b16 %v94
    %v108 = vpack.c.b16 %v107, %v106
    %vm110 = vcmask 130048
    %v112 = vsel %vm110, %v103, 0
    %114 = vmatpush.bf16.msra.mxu0 0
    %115 = vmatpush.bf16.msra.mxu0 0
    %116 = vmatpush.bf16.msra.mxu0 0
    %117 = vmatpush.bf16.msra.mxu0 0
    %118 = vmatpush.bf16.msra.mxu0 0
    %119 = vmatpush.bf16.msra.mxu0 0
    %120 = vmatpush.bf16.msra.mxu0 0
    %121 = vmatpush.bf16.msra.mxu0 %v108
    %122 = vmatmul.bf16.gmra.mxu0 %v112
    %v123 = vpop.f32.mrf.mxu0
    %v124 = vadd.f32 %v97, %v123
    %v125 = vpop.f32.mrf.mxu0
    %v126 = vadd.f32 %v97, %v125
    %127 = vdwg.mxu0
    %v128 = vmax.f32 %v124, 0.0
    %v129 = vmax.f32 %v126, 0.0
    %v130 = vld [vmem:[#allocation7] sm:$0xf]
    %v131 = vld [vmem:[#allocation7 + $0x4] sm:$0xf]
    %v132 = vld [vmem:[#allocation7 + $0x8] sm:$0xf]
    %v133 = vld [vmem:[#allocation7 + $0xc] sm:$0xf]
    %v134 = vld [vmem:[#allocation7 + $0x10] sm:$0xf]
    %v135 = vld [vmem:[#allocation7 + $0x14] sm:$0xf]
    %v136 = vld [vmem:[#allocation7 + $0x18] sm:$0xf]
    %v137 = vld [vmem:[#allocation7 + $0x1c] sm:$0xf]
    %v138 = vld [vmem:[#allocation7 + $0x20] sm:$0xf]
    %v139 = vld [vmem:[#allocation7 + $0x24] sm:$0xf]
    %v140 = vld [vmem:[#allocation7 + $0x28] sm:$0xf]
    %v141 = vld [vmem:[#allocation7 + $0x2c] sm:$0xf]
    %v142 = vld [vmem:[#allocation7 + $0x30] sm:$0xf]
    %v143 = vld [vmem:[#allocation7 + $0x34] sm:$0xf]
    %v144 = vld [vmem:[#allocation7 + $0x38] sm:$0xf]
    %v145 = vld [vmem:[#allocation7 + $0x3c] sm:$0xf]
    %v146 = vld [vmem:[%s4] sm:$0x1]
    %v147 = vpack.c.bf16 %v129, %v128
    %v149 = vperm.slane %v146, 0
    %v167 = vunpack.c.l.b16 %v130
    %v168 = vunpack.c.l.b16 %v131
    %v169 = vunpack.c.l.b16 %v132
    %v170 = vunpack.c.l.b16 %v133
    %v171 = vunpack.c.l.b16 %v134
    %v172 = vunpack.c.l.b16 %v135
    %v173 = vunpack.c.l.b16 %v136
    %v174 = vunpack.c.l.b16 %v137
    %v175 = vunpack.c.l.b16 %v138
    %v176 = vunpack.c.l.b16 %v139
    %v177 = vunpack.c.l.b16 %v140
    %v178 = vunpack.c.l.b16 %v141
    %v179 = vunpack.c.l.b16 %v142
    %v180 = vunpack.c.l.b16 %v143
    %v181 = vunpack.c.l.b16 %v144
    %v182 = vunpack.c.l.b16 %v145
    %v183 = vpack.c.b16 %v168, %v167
    %v184 = vpack.c.b16 %v170, %v169
    %v185 = vpack.c.b16 %v172, %v171
    %v186 = vpack.c.b16 %v174, %v173
    %v187 = vpack.c.b16 %v176, %v175
    %v188 = vpack.c.b16 %v178, %v177
    %v189 = vpack.c.b16 %v180, %v179
    %v190 = vpack.c.b16 %v182, %v181
    %199 = vmatpush.bf16.msra.mxu0 %v190
    %200 = vmatpush.bf16.msra.mxu0 %v189
    %201 = vmatpush.bf16.msra.mxu0 %v188
    %202 = vmatpush.bf16.msra.mxu0 %v187
    %203 = vmatpush.bf16.msra.mxu0 %v186
    %204 = vmatpush.bf16.msra.mxu0 %v185
    %205 = vmatpush.bf16.msra.mxu0 %v184
    %206 = vmatpush.bf16.msra.mxu0 %v183
    %207 = vmatmul.bf16.gmra.mxu0 %v147
    %v208 = vpop.f32.mrf.mxu0
    %v209 = vadd.f32 %v149, %v208
    %v210 = vpop.f32.mrf.mxu0
    %v211 = vadd.f32 %v149, %v210
    %212 = vdwg.mxu0
    %v213 = vmax.f32 %v209, 0.0
    %v214 = vmax.f32 %v211, 0.0
    %v215 = vld [vmem:[#allocation8] sm:$0xf]
    %v216 = vld [vmem:[#allocation8 + $0x4] sm:$0xf]
    %v217 = vld [vmem:[#allocation8 + $0x8] sm:$0xf]
    %v218 = vld [vmem:[#allocation8 + $0xc] sm:$0xf]
    %v219 = vld [vmem:[#allocation8 + $0x10] sm:$0xf]
    %v220 = vld [vmem:[#allocation8 + $0x14] sm:$0xf]
    %v221 = vld [vmem:[#allocation8 + $0x18] sm:$0xf]
    %v222 = vld [vmem:[#allocation8 + $0x1c] sm:$0xf]
    %v223 = vld [vmem:[#allocation8 + $0x20] sm:$0xf]
    %v224 = vld [vmem:[#allocation8 + $0x24] sm:$0xf]
    %v225 = vld [vmem:[#allocation8 + $0x28] sm:$0xf]
    %v226 = vld [vmem:[#allocation8 + $0x2c] sm:$0xf]
    %v227 = vld [vmem:[#allocation8 + $0x30] sm:$0xf]
    %v228 = vld [vmem:[#allocation8 + $0x34] sm:$0xf]
    %v229 = vld [vmem:[#allocation8 + $0x38] sm:$0xf]
    %v230 = vld [vmem:[#allocation8 + $0x3c] sm:$0xf]
    %v231 = vld [vmem:[%s6] sm:$0x1]
    %v232 = vpack.c.bf16 %v214, %v213
    %v234 = vperm.slane %v231, 0
    %v252 = vunpack.c.l.b16 %v215
    %v253 = vunpack.c.l.b16 %v216
    %v254 = vunpack.c.l.b16 %v217
    %v255 = vunpack.c.l.b16 %v218
    %v256 = vunpack.c.l.b16 %v219
    %v257 = vunpack.c.l.b16 %v220
    %v258 = vunpack.c.l.b16 %v221
    %v259 = vunpack.c.l.b16 %v222
    %v260 = vunpack.c.l.b16 %v223
    %v261 = vunpack.c.l.b16 %v224
    %v262 = vunpack.c.l.b16 %v225
    %v263 = vunpack.c.l.b16 %v226
    %v264 = vunpack.c.l.b16 %v227
    %v265 = vunpack.c.l.b16 %v228
    %v266 = vunpack.c.l.b16 %v229
    %v267 = vunpack.c.l.b16 %v230
    %v268 = vpack.c.b16 %v253, %v252
    %v269 = vpack.c.b16 %v255, %v254
    %v270 = vpack.c.b16 %v257, %v256
    %v271 = vpack.c.b16 %v259, %v258
    %v272 = vpack.c.b16 %v261, %v260
    %v273 = vpack.c.b16 %v263, %v262
    %v274 = vpack.c.b16 %v265, %v264
    %v275 = vpack.c.b16 %v267, %v266
    %284 = vmatpush.bf16.msra.mxu0 %v275
    %285 = vmatpush.bf16.msra.mxu0 %v274
    %286 = vmatpush.bf16.msra.mxu0 %v273
    %287 = vmatpush.bf16.msra.mxu0 %v272
    %288 = vmatpush.bf16.msra.mxu0 %v271
    %289 = vmatpush.bf16.msra.mxu0 %v270
    %290 = vmatpush.bf16.msra.mxu0 %v269
    %291 = vmatpush.bf16.msra.mxu0 %v268
    %292 = vmatmul.bf16.gmra.mxu0 %v232
    %v293 = vpop.f32.mrf.mxu0
    %v294 = vadd.f32 %v234, %v293
    %v295 = vpop.f32.mrf.mxu0
    %v296 = vadd.f32 %v234, %v295
    %297 = vdwg.mxu0
    %298 = vst [vmem:[#allocation10] sm:$0xff] %v294
    %299 = vst [vmem:[#allocation10 + $0x8] sm:$0xff] %v296
    // Predicated region
    $region46: #{tpu_custom_call.1} parent=1 // pred_check
      _
    $region47: #{tpu_custom_call.1} parent=1 // pred_check_branch
      %301 = sbr.rel (0) target = $region49
    $region48: #{tpu_custom_call.1} parent=1 // pred_region
      %303 = vsyncadd [#allocation4], 0
      %s304 = sshll.u32 [#allocation10], 4
      %s305 = int_to_ptr.vmem [resolvable:$true] %s304
      %s306 = sshll.u32 %s7, 4
      %s307 = int_to_ptr.hbm [resolvable:$true] %s306
      %312 = dma.vmem_to_hbm [thread:$0]  %s305, 256, %s307, [#allocation4], 128, 128, 8
    $region49: #{tpu_custom_call.1} parent=1 // pred_fallthru
      _
    // Predicated region
    $region50: #{tpu_custom_call.1} parent=1 // pred_check
      _
    $region51: #{tpu_custom_call.1} parent=1 // pred_check_branch
      %314 = sbr.rel (0) target = $region53
    $region52: #{tpu_custom_call.1} parent=1 // pred_region
      %316 = dma.done [#allocation4], 256
    $region53: #{tpu_custom_call.1} parent=1 // pred_fallthru
      _
    %317 = vsyncpa [#allocation3], 1
    %318 = vsyncpa [#allocation6], 1
    %319 = vsyncpa [#allocation9], 1
    %320 = vsyncpa [#allocation4], 1

</llo_original>
